<compile_context>
chip_gen: v7x
topology: tpu7x:2x2x1
jax: 0.10.0
libtpu: 0.0.40
codegen_flags: <defaults>
</compile_context>

<pallas_src>
import functools
import math

import jax
import jax.numpy as jnp
from jax.experimental import pallas as pl
from jax.experimental.pallas import tpu as pltpu


# ----------------------- generation-aware VMEM budgets -----------------------


def _detect_vmem_capacity():
    try:
        info = pltpu.get_tpu_info()
        for attr in ("vmem_capacity_bytes", "vmem_bytes"):
            v = getattr(info, attr, None)
            if v:
                return int(v)
    except Exception:
        pass
    return 64 * 1024 * 1024        # conservative default: v7x physical VMEM/TC


_VMEM_CAP = _detect_vmem_capacity()
# Leave headroom for Mosaic-internal scratch and double-buffered streams.
VMEM_LIMIT_BYTES = min(int(_VMEM_CAP * 3 // 4), 100 * 1024 * 1024)
_BIG_VMEM = _VMEM_CAP >= 96 * 1024 * 1024          # v5e / v6e (128 MiB parts)
_MM_TM = 512 if _BIG_VMEM else 256                 # matmul M tile target
_MM_TN = 1024 if _BIG_VMEM else 512                # matmul N tile target
_MM_TK = 1024 if _BIG_VMEM else 512                # matmul K tile target


def _tile(dim, target, aligns):
    """Largest tile <= target dividing `dim`, preferring the first alignment
    in `aligns` that admits a divisor.  Falls back to the full dim (always a
    legal BlockSpec).  At the tiny demo shapes this returns the full dim."""
    if dim <= target:
        return dim
    for align in aligns:
        t = (target // align) * align
        while t >= align:
            if dim % t == 0:
                return t
            t -= align
    return dim


@functools.lru_cache(maxsize=None)
def _buffered_supported():
    """Probe whether BlockSpec(pipeline_mode=pl.Buffered(1)) lowers and runs.

    Single-buffering constant-index weights halves their resident VMEM
    footprint; silently fall back if this JAX/Mosaic build rejects it."""
    try:
        def _k(x_ref, o_ref):
            o_ref[...] = x_ref[...]
        x = jnp.zeros((8, 128), jnp.float32)
        out = pl.pallas_call(
            _k,
            grid=(1,),
            in_specs=[pl.BlockSpec((8, 128), lambda i: (0, 0),
                                   pipeline_mode=pl.Buffered(1))],
            out_specs=pl.BlockSpec((8, 128), lambda i: (0, 0)),
            out_shape=jax.ShapeDtypeStruct((8, 128), jnp.float32),
        )(x)
        jax.block_until_ready(out)
        return True
    except Exception:
        return False


def _const_spec(block_shape, index_map):
    """BlockSpec for an input whose block index never changes (weights/bias):
    request single buffering when supported."""
    if _buffered_supported():
        return pl.BlockSpec(block_shape, index_map,
                            pipeline_mode=pl.Buffered(1))
    return pl.BlockSpec(block_shape, index_map)


# ----------------------------- Pallas kernels -------------------------------


def _matmul_bias_kernel(x_ref, w_ref, b_ref, o_ref, acc_ref, *, activation):
    # Grid = (M/tm, N/tn, K/tk); K is the innermost (reduction) axis.
    @pl.when(pl.program_id(2) == 0)
    def _():
        acc_ref[...] = jnp.zeros_like(acc_ref)

    acc_ref[...] += jnp.dot(x_ref[...], w_ref[...],
                            preferred_element_type=jnp.float32)

    @pl.when(pl.program_id(2) == pl.num_programs(2) - 1)
    def _():
        y = acc_ref[...] + b_ref[...]
        if activation == "gelu":
            # exact GELU (erf formulation, matches torch.nn.GELU default)
            y = 0.5 * y * (1.0 + jax.lax.erf(y * (1.0 / math.sqrt(2.0))))
        o_ref[...] = y.astype(o_ref.dtype)


def matmul_bias(x, w, b, *, out_dtype=jnp.float32, activation=None):
    """(M, K) @ (K, N) + b.  bf16 MXU inputs, f32 accumulation; `out_dtype`
    lets consumers that feed another matmul take bf16 straight away."""
    M, K = x.shape
    Kw, N = w.shape
    assert K == Kw
    tm = _tile(M, _MM_TM, (128, 16, 8))
    tn = _tile(N, _MM_TN, (128,))
    tk = _tile(K, _MM_TK, (128,))
    grid = (M // tm, N // tn, K // tk)
    if N == tn:
        b_spec = _const_spec((1, tn), lambda i, j, k: (0, j))
    else:
        b_spec = pl.BlockSpec((1, tn), lambda i, j, k: (0, j))
    return pl.pallas_call(
        functools.partial(_matmul_bias_kernel, activation=activation),
        grid=grid,
        in_specs=[
            pl.BlockSpec((tm, tk), lambda i, j, k: (i, k)),
            pl.BlockSpec((tk, tn), lambda i, j, k: (k, j)),
            b_spec,
        ],
        out_specs=pl.BlockSpec((tm, tn), lambda i, j, k: (i, j)),
        out_shape=jax.ShapeDtypeStruct((M, N), out_dtype),
        scratch_shapes=[pltpu.VMEM((tm, tn), jnp.float32)],
        compiler_params=pltpu.CompilerParams(
            dimension_semantics=("parallel", "parallel", "arbitrary"),
            vmem_limit_bytes=VMEM_LIMIT_BYTES),
    )(x.astype(jnp.bfloat16), w.astype(jnp.bfloat16),
      b.reshape(1, N).astype(jnp.float32))


def _matmul_bias_res_ln_kernel(x_ref, w_ref, b_ref, r_ref, g_ref, bb_ref,
                               o_ref, acc_ref, *, eps):
    # Grid = (M/tm, K/tk); N (= d_model) lives fully in one tile for the LN.
    @pl.when(pl.program_id(1) == 0)
    def _():
        acc_ref[...] = jnp.zeros_like(acc_ref)

    acc_ref[...] += jnp.dot(x_ref[...], w_ref[...],
                            preferred_element_type=jnp.float32)

    @pl.when(pl.program_id(1) == pl.num_programs(1) - 1)
    def _():
        z = acc_ref[...] + b_ref[...] + r_ref[...].astype(jnp.float32)
        mean = jnp.mean(z, axis=-1, keepdims=True)
        zc = z - mean
        var = jnp.mean(zc * zc, axis=-1, keepdims=True)
        inv = jax.lax.rsqrt(var + eps)
        o_ref[...] = ((zc * inv) * g_ref[...] + bb_ref[...]).astype(o_ref.dtype)


def matmul_bias_res_ln(x, w, b, res, gamma, beta, *, eps=1e-5,
                       out_dtype=jnp.bfloat16):
    """LayerNorm(res + x @ w + b) with residual+LN fused into the matmul
    epilogue (saves one HBM write + two reads of the (M, N) activation)."""
    M, K = x.shape
    Kw, N = w.shape
    assert K == Kw and res.shape == (M, N)
    if N > 4096:
        # LN needs the full row in one tile -> fall back to separate kernels.
        y = matmul_bias(x, w, b, out_dtype=jnp.float32)
        return layernorm_residual(y, res, gamma, beta, eps=eps,
                                  out_dtype=out_dtype)
    tm = _tile(M, _MM_TM, (128, 16, 8))
    tk = _tile(K, _MM_TK, (128,))
    grid = (M // tm, K // tk)
    return pl.pallas_call(
        functools.partial(_matmul_bias_res_ln_kernel, eps=eps),
        grid=grid,
        in_specs=[
            pl.BlockSpec((tm, tk), lambda i, k: (i, k)),
            pl.BlockSpec((tk, N), lambda i, k: (k, 0)),
            _const_spec((1, N), lambda i, k: (0, 0)),
            pl.BlockSpec((tm, N), lambda i, k: (i, 0)),
            _const_spec((1, N), lambda i, k: (0, 0)),
            _const_spec((1, N), lambda i, k: (0, 0)),
        ],
        out_specs=pl.BlockSpec((tm, N), lambda i, k: (i, 0)),
        out_shape=jax.ShapeDtypeStruct((M, N), out_dtype),
        scratch_shapes=[pltpu.VMEM((tm, N), jnp.float32)],
        compiler_params=pltpu.CompilerParams(
            dimension_semantics=("parallel", "arbitrary"),
            vmem_limit_bytes=VMEM_LIMIT_BYTES),
    )(x.astype(jnp.bfloat16), w.astype(jnp.bfloat16),
      b.reshape(1, N).astype(jnp.float32), res,
      gamma.reshape(1, N).astype(jnp.float32),
      beta.reshape(1, N).astype(jnp.float32))


def _ffn_res_ln_kernel(x_ref, w1_ref, b1_ref, w2_ref, b2_ref, g_ref, bb_ref,
                       o_ref, *, eps):
    # Fused FFN: the (tm, 4*D) hidden activation lives only in VMEM/vregs,
    # and residual + LayerNorm happen in the same epilogue.
    x = x_ref[...]                                             # (tm, D) bf16
    h = jnp.dot(x, w1_ref[...], preferred_element_type=jnp.float32)
    h = h + b1_ref[...]
    h = 0.5 * h * (1.0 + jax.lax.erf(h * (1.0 / math.sqrt(2.0))))  # exact GELU
    y = jnp.dot(h.astype(jnp.bfloat16), w2_ref[...],
                preferred_element_type=jnp.float32)
    z = y + b2_ref[...] + x.astype(jnp.float32)                 # + residual
    mean = jnp.mean(z, axis=-1, keepdims=True)
    zc = z - mean
    var = jnp.mean(zc * zc, axis=-1, keepdims=True)
    inv = jax.lax.rsqrt(var + eps)
    o_ref[...] = ((zc * inv) * g_ref[...] + bb_ref[...]).astype(o_ref.dtype)


def ffn_residual_ln(x, w1, b1, w2, b2, gamma, beta, *, eps=1e-5,
                    out_dtype=jnp.bfloat16):
    """LayerNorm(x + GELU(x@w1+b1)@w2+b2).  Fully fused when W1/W2 fit VMEM;
    otherwise two grid-tiled matmuls with res+LN fused into the second."""
    M, D = x.shape
    H = w1.shape[1]
    weight_bytes = 2 * (D * H + H * D)                  # bf16 weights
    if not _buffered_supported():
        weight_bytes *= 2                               # default double buffer
    if weight_bytes > VMEM_LIMIT_BYTES // 2 or D > 4096:
        # TODO(synk): add a hidden-dim grid axis + f32 accumulator so the
        # 4*d_model hidden activation stays out of HBM at very large d_model.
        h = matmul_bias(x, w1, b1, out_dtype=jnp.bfloat16, activation="gelu")
        return matmul_bias_res_ln(h, w2, b2, x, gamma, beta, eps=eps,
                                  out_dtype=out_dtype)
    tm = _tile(M, _MM_TM, (128, 16, 8))
    return pl.pallas_call(
        functools.partial(_ffn_res_ln_kernel, eps=eps),
        grid=(M // tm,),
        in_specs=[
            pl.BlockSpec((tm, D), lambda i: (i, 0)),
            _const_spec((D, H), lambda i: (0, 0)),
            _const_spec((1, H), lambda i: (0, 0)),
            _const_spec((H, D), lambda i: (0, 0)),
            _const_spec((1, D), lambda i: (0, 0)),
            _const_spec((1, D), lambda i: (0, 0)),
            _const_spec((1, D), lambda i: (0, 0)),
        ],
        out_specs=pl.BlockSpec((tm, D), lambda i: (i, 0)),
        out_shape=jax.ShapeDtypeStruct((M, D), out_dtype),
        compiler_params=pltpu.CompilerParams(
            dimension_semantics=("parallel",),
            vmem_limit_bytes=VMEM_LIMIT_BYTES),
    )(x.astype(jnp.bfloat16), w1.astype(jnp.bfloat16),
      b1.reshape(1, H).astype(jnp.float32),
      w2.astype(jnp.bfloat16), b2.reshape(1, D).astype(jnp.float32),
      gamma.reshape(1, D).astype(jnp.float32),
      beta.reshape(1, D).astype(jnp.float32))


def _ln_residual_kernel(x_ref, y_ref, g_ref, b_ref, o_ref, *, eps):
    z = x_ref[...].astype(jnp.float32) + y_ref[...].astype(jnp.float32)
    mean = jnp.mean(z, axis=-1, keepdims=True)
    zc = z - mean
    var = jnp.mean(zc * zc, axis=-1, keepdims=True)
    inv = jax.lax.rsqrt(var + eps)
    o_ref[...] = ((zc * inv) * g_ref[...] + b_ref[...]).astype(o_ref.dtype)


def _ln_kernel(x_ref, g_ref, b_ref, o_ref, *, eps):
    z = x_ref[...].astype(jnp.float32)
    mean = jnp.mean(z, axis=-1, keepdims=True)
    zc = z - mean
    var = jnp.mean(zc * zc, axis=-1, keepdims=True)
    inv = jax.lax.rsqrt(var + eps)
    o_ref[...] = ((zc * inv) * g_ref[...] + b_ref[...]).astype(o_ref.dtype)


def layernorm_residual(x, y, gamma, beta, *, eps=1e-5, out_dtype=jnp.bfloat16):
    """LayerNorm(x + y) over last dim (fallback path for very large d_model)."""
    M, D = x.shape
    tm = _tile(M, 512, (128, 16, 8))
    return pl.pallas_call(
        functools.partial(_ln_residual_kernel, eps=eps),
        grid=(M // tm,),
        in_specs=[
            pl.BlockSpec((tm, D), lambda i: (i, 0)),
            pl.BlockSpec((tm, D), lambda i: (i, 0)),
            _const_spec((1, D), lambda i: (0, 0)),
            _const_spec((1, D), lambda i: (0, 0)),
        ],
        out_specs=pl.BlockSpec((tm, D), lambda i: (i, 0)),
        out_shape=jax.ShapeDtypeStruct((M, D), out_dtype),
        compiler_params=pltpu.CompilerParams(
            dimension_semantics=("parallel",),
            vmem_limit_bytes=VMEM_LIMIT_BYTES),
    )(x, y, gamma.reshape(1, D).astype(jnp.float32),
      beta.reshape(1, D).astype(jnp.float32))


def layernorm(x, gamma, beta, *, eps=1e-5, out_dtype=jnp.bfloat16):
    """Plain LayerNorm over last dim (no residual, no zero-tensor DMA)."""
    M, D = x.shape
    tm = _tile(M, 512, (128, 16, 8))
    return pl.pallas_call(
        functools.partial(_ln_kernel, eps=eps),
        grid=(M // tm,),
        in_specs=[
            pl.BlockSpec((tm, D), lambda i: (i, 0)),
            _const_spec((1, D), lambda i: (0, 0)),
            _const_spec((1, D), lambda i: (0, 0)),
        ],
        out_specs=pl.BlockSpec((tm, D), lambda i: (i, 0)),
        out_shape=jax.ShapeDtypeStruct((M, D), out_dtype),
        compiler_params=pltpu.CompilerParams(
            dimension_semantics=("parallel",),
            vmem_limit_bytes=VMEM_LIMIT_BYTES),
    )(x, gamma.reshape(1, D).astype(jnp.float32),
      beta.reshape(1, D).astype(jnp.float32))


def _attention_kernel(q_ref, kv_ref, mask_ref, o_ref, o_acc, *,
                      heads, d_k, scale, causal, q_off, k_off, v_off, tq):
    # One (batch, query-tile) per grid step; all heads handled here.
    q = q_ref[0]                      # (tq, q_width)  bf16
    kv = kv_ref[0]                    # (Tk, kv_width) bf16
    Tk = kv.shape[0]
    allow = jnp.broadcast_to(mask_ref[...] > 0.5, (tq, Tk))   # padding mask
    if causal:
        base = pl.program_id(1) * tq
        row = jax.lax.broadcasted_iota(jnp.int32, (tq, Tk), 0) + base
        col = jax.lax.broadcasted_iota(jnp.int32, (tq, Tk), 1)
        allow = jnp.logical_and(allow, col <= row)
    # TODO(synk): for long sequences add a KV grid axis with flash-style
    # online softmax instead of materializing (tq, Tk) scores per head.
    for h in range(heads):
        qh = q[:, q_off + h * d_k:q_off + (h + 1) * d_k]
        kh = kv[:, k_off + h * d_k:k_off + (h + 1) * d_k]
        vh = kv[:, v_off + h * d_k:v_off + (h + 1) * d_k]
        # contract on d_k without materializing k^T
        s = jax.lax.dot_general(qh, kh, (((1,), (1,)), ((), ())),
                                preferred_element_type=jnp.float32) * scale
        s = jnp.where(allow, s, -1e9)
        s = s - jnp.max(s, axis=-1, keepdims=True)
        p = jnp.exp(s)
        p = p * pl.reciprocal(jnp.sum(p, axis=-1, keepdims=True), approx=True)
        o_acc[:, h * d_k:(h + 1) * d_k] = jnp.dot(
            p.astype(jnp.bfloat16), vh, preferred_element_type=jnp.float32)
    # Single full-width store (no per-head masked partial stores to HBM).
    o_ref[0] = o_acc[...].astype(o_ref.dtype)


def attention(q_arr, kv_arr, mask, *, heads, d_k, causal,
              q_col, k_col, v_col, out_dtype=jnp.bfloat16):
    """Multi-head attention on a lane-dense (B, T, width) layout.

    q / k / v are column blocks (width heads*d_k) number q_col / k_col /
    v_col inside q_arr / kv_arr, so fused QKV / KV projection outputs are
    consumed directly with no JAX-side slice round-trips through HBM.
    mask: (B, Tk) float {0,1}.
    """
    B, Tq, qw = q_arr.shape
    _, Tk, kvw = kv_arr.shape
    hd = heads * d_k
    scale = 1.0 / math.sqrt(d_k)
    tq = _tile(Tq, 256, (128, 16, 8))
    kernel = functools.partial(
        _attention_kernel, heads=heads, d_k=d_k, scale=scale, causal=causal,
        q_off=q_col * hd, k_off=k_col * hd, v_off=v_col * hd, tq=tq)
    return pl.pallas_call(
        kernel,
        grid=(B, Tq // tq),
        in_specs=[
            pl.BlockSpec((1, tq, qw), lambda b, i: (b, i, 0)),
            pl.BlockSpec((1, Tk, kvw), lambda b, i: (b, 0, 0)),
            pl.BlockSpec((1, Tk), lambda b, i: (b, 0)),
        ],
        out_specs=pl.BlockSpec((1, tq, hd), lambda b, i: (b, i, 0)),
        out_shape=jax.ShapeDtypeStruct((B, Tq, hd), out_dtype),
        scratch_shapes=[pltpu.VMEM((tq, hd), jnp.float32)],
        compiler_params=pltpu.CompilerParams(
            dimension_semantics=("parallel", "parallel"),
            vmem_limit_bytes=VMEM_LIMIT_BYTES),
    )(q_arr.astype(jnp.bfloat16), kv_arr.astype(jnp.bfloat16), mask)


# ------------------------------ model (glue) --------------------------------


def decoder_block(enc_out, x, p, enc_mask, dec_mask, *, heads, d_k):
    B, T, dm = x.shape
    Te = enc_out.shape[1]
    hd = heads * d_k

    # --- causal self-attention: fused QKV projection, consumed in place ---
    qkv = matmul_bias(x.reshape(B * T, dm), p["sa_w_qkv"], p["sa_b_qkv"],
                      out_dtype=jnp.bfloat16).reshape(B, T, 3 * hd)
    a = attention(qkv, qkv, dec_mask, heads=heads, d_k=d_k, causal=True,
                  q_col=0, k_col=1, v_col=2)
    # output projection + residual + LayerNorm fused in one kernel
    x = matmul_bias_res_ln(a.reshape(B * T, hd), p["sa_wo"], p["sa_bo"],
                           x.reshape(B * T, dm), p["ln1_g"], p["ln1_b"],
                           out_dtype=jnp.bfloat16).reshape(B, T, dm)

    # --- cross-attention: fused KV projection over encoder output ---
    q = matmul_bias(x.reshape(B * T, dm), p["ca_wq"], p["ca_bq"],
                    out_dtype=jnp.bfloat16).reshape(B, T, hd)
    kv = matmul_bias(enc_out.reshape(B * Te, dm), p["ca_w_kv"], p["ca_b_kv"],
                     out_dtype=jnp.bfloat16).reshape(B, Te, 2 * hd)
    a = attention(q, kv, enc_mask, heads=heads, d_k=d_k, causal=False,
                  q_col=0, k_col=0, v_col=1)
    x = matmul_bias_res_ln(a.reshape(B * T, hd), p["ca_wo"], p["ca_bo"],
                           x.reshape(B * T, dm), p["ln2_g"], p["ln2_b"],
                           out_dtype=jnp.bfloat16).reshape(B, T, dm)

    # --- FFN + residual + LayerNorm (fully fused; hidden stays in VMEM) ---
    x = ffn_residual_ln(x.reshape(B * T, dm), p["w1"], p["b1"],
                        p["w2"], p["b2"], p["ln3_g"], p["ln3_b"],
                        out_dtype=jnp.bfloat16).reshape(B, T, dm)
    # TODO(synk): nn.Dropout layers are identity in eval mode; no stochastic path.
    return x


def decoder_forward(params, encoder_output, decoder_input,
                    encoder_mask, decoder_mask, *, heads, d_k):
    B, T = decoder_input.shape
    dm = params["emb"].shape[1]
    x = jnp.take(params["emb"], decoder_input, axis=0)      # embedding (glue)
    x = x + params["pe"][:T][None, :, :]                    # positional enc.
    x = x.astype(jnp.bfloat16)                              # bf16 activations
    enc = encoder_output.astype(jnp.bfloat16)
    for bp in params["blocks"]:
        x = decoder_block(enc, x, bp, encoder_mask, decoder_mask,
                          heads=heads, d_k=d_k)
    x_flat = layernorm(x.reshape(B * T, dm), params["ln_f_g"],
                       params["ln_f_b"], out_dtype=jnp.bfloat16)
    logits = matmul_bias(x_flat, params["w_out"], params["b_out"],
                         out_dtype=jnp.float32)
    vocab = params["w_out"].shape[1]
    return logits.reshape(B, T, vocab)


# ------------------------- deterministic param init -------------------------


def sinusoidal_pe(max_len, d_m):
    pos = jnp.arange(max_len, dtype=jnp.float32)[:, None]
    i = jnp.arange(0, d_m, 2, dtype=jnp.float32)
    div = jnp.exp(-jnp.log(10000.0) * i / d_m)
    pe = jnp.zeros((max_len, d_m), jnp.float32)
    pe = pe.at[:, 0::2].set(jnp.sin(pos * div))
    pe = pe.at[:, 1::2].set(jnp.cos(pos * div))
    return pe


def _dense(key, fan_in, fan_out):
    # weights stored bf16 (MXU path); biases stay f32 (added to f32 acc).
    w = (jax.random.normal(key, (fan_in, fan_out), jnp.float32) * 0.02)
    return w.astype(jnp.bfloat16), jnp.zeros((fan_out,), jnp.float32)


def init_params(key, d_k, d_m, heads, vocab, max_len, n_blocks):
    keys = jax.random.split(key, 2 + n_blocks)
    params = {
        "emb": jax.random.normal(keys[0], (vocab, d_m), jnp.float32) * 0.02,
        "pe": sinusoidal_pe(max_len, d_m),
        "ln_f_g": jnp.ones((d_m,), jnp.float32),
        "ln_f_b": jnp.zeros((d_m,), jnp.float32),
    }
    params["w_out"], params["b_out"] = _dense(keys[1], d_m, vocab)

    hd = heads * d_k
    blocks = []
    for i in range(n_blocks):
        bk = jax.random.split(keys[2 + i], 8)
        bp = {}
        # self-attention: fused QKV + output proj
        bp["sa_w_qkv"], bp["sa_b_qkv"] = _dense(bk[0], d_m, 3 * hd)
        bp["sa_wo"], bp["sa_bo"] = _dense(bk[1], hd, d_m)
        # cross-attention: Q + fused KV + output proj
        bp["ca_wq"], bp["ca_bq"] = _dense(bk[2], d_m, hd)
        bp["ca_w_kv"], bp["ca_b_kv"] = _dense(bk[3], d_m, 2 * hd)
        bp["ca_wo"], bp["ca_bo"] = _dense(bk[4], hd, d_m)
        # FFN
        bp["w1"], bp["b1"] = _dense(bk[5], d_m, d_m * 4)
        bp["w2"], bp["b2"] = _dense(bk[6], d_m * 4, d_m)
        for name in ("ln1", "ln2", "ln3"):
            bp[name + "_g"] = jnp.ones((d_m,), jnp.float32)
            bp[name + "_b"] = jnp.zeros((d_m,), jnp.float32)
        blocks.append(bp)
    params["blocks"] = blocks
    return params


# ----------------------------------- main ------------------------------------


if __name__ == "__main__":
    d_k, d_m, heads = 8, 32, 4
    vocab, max_len = 50, 16
    n_blocks = 2
    B, T_dec, T_enc = 2, 8, 8

    key = jax.random.PRNGKey(0)
    kp, k1, k2 = jax.random.split(key, 3)

    params = init_params(kp, d_k, d_m, heads, vocab, max_len, n_blocks)
    decoder_input = jax.random.randint(k1, (B, T_dec), 0, vocab)
    encoder_output = jax.random.normal(k2, (B, T_enc, d_m), jnp.float32)
    encoder_mask = jnp.ones((B, T_enc), jnp.float32)
    decoder_mask = jnp.ones((B, T_dec), jnp.float32)

    logits = decoder_forward(params, encoder_output, decoder_input,
                             encoder_mask, decoder_mask, heads=heads, d_k=d_k)
    jax.block_until_ready(logits)
    assert logits.shape == (B, T_dec, vocab)
    assert bool(jnp.all(jnp.isfinite(logits)))
    print("KERNEL_OK")
</pallas_src>

<mosaic_0001>
module attributes {stable_mosaic.version = 11 : i64} {
  func.func @_k(%arg0: i32, %arg1: memref<8x128xf32, #tpu.memory_space<vmem>>, %arg2: memref<8x128xf32, #tpu.memory_space<vmem>>) attributes {dimension_semantics = [#tpu.dimension_semantics<arbitrary>], iteration_bounds = array<i64: 1>, scalar_prefetch = 0 : i64, scratch_operands = 0 : i64, tpu.core_type = #tpu.core_type<tc>, window_params = [{pipeline_mode = #tpu.pipeline_mode<synchronous>, transform_indices = @transform_0, window_bounds = array<i64: 8, 128>}, {pipeline_mode = #tpu.pipeline_mode<synchronous>, transform_indices = @transform_1, window_bounds = array<i64: 8, 128>}]} {
    %c0 = arith.constant 0 : index
    %c0_0 = arith.constant 0 : index
    %0 = vector.load %arg1[%c0, %c0_0] : memref<8x128xf32, #tpu.memory_space<vmem>>, vector<8x128xf32>
    %c0_1 = arith.constant 0 : index
    %c0_2 = arith.constant 0 : index
    %1 = vector.load %arg2[%c0_1, %c0_2] : memref<8x128xf32, #tpu.memory_space<vmem>>, vector<8x128xf32>
    tpu.vector_store %arg2[%c0_1, %c0_2], %0 {strides = array<i32>} : memref<8x128xf32, #tpu.memory_space<vmem>>, vector<8x128xf32>,
    return
  }
  func.func @transform_0(%arg0: i32) -> (i32, i32) {
    %c0_i32 = arith.constant 0 : i32
    %c0_i32_0 = arith.constant 0 : i32
    %c0_i32_1 = arith.constant 0 : i32
    return %c0_i32, %c0_i32_0 : i32, i32
  }
  func.func @transform_1(%arg0: i32) -> (i32, i32) {
    %c0_i32 = arith.constant 0 : i32
    %c0_i32_0 = arith.constant 0 : i32
    %c0_i32_1 = arith.constant 0 : i32
    return %c0_i32, %c0_i32_0 : i32, i32
  }
}

module attributes {stable_mosaic.version = 11 : i64} {
  func.func @_matmul_bias_kernel(%arg0: i32, %arg1: i32, %arg2: i32, %arg3: memref<16x32xbf16, #tpu.memory_space<vmem>>, %arg4: memref<32x96xbf16, #tpu.memory_space<vmem>>, %arg5: memref<1x96xf32, #tpu.memory_space<vmem>>, %arg6: memref<16x96xbf16, #tpu.memory_space<vmem>>, %arg7: memref<16x96xf32, #tpu.memory_space<vmem>>) attributes {dimension_semantics = [#tpu.dimension_semantics<parallel>, #tpu.dimension_semantics<parallel>, #tpu.dimension_semantics<arbitrary>], iteration_bounds = array<i64: 1, 1, 1>, scalar_prefetch = 0 : i64, scratch_operands = 1 : i64, tpu.core_type = #tpu.core_type<tc>, window_params = [{transform_indices = @transform_0, window_bounds = array<i64: 16, 32>}, {transform_indices = @transform_1, window_bounds = array<i64: 32, 96>}, {transform_indices = @transform_2, window_bounds = array<i64: 1, 96>}, {transform_indices = @transform_3, window_bounds = array<i64: 16, 96>}]} {
    %c0_i32 = arith.constant 0 : i32
    %0 = arith.cmpi eq, %arg2, %c0_i32 : i32
    %1 = arith.extui %0 : i1 to i32
    %c0_i32_0 = arith.constant 0 : i32
    %2 = arith.cmpi ne, %1, %c0_i32_0 : i32
    scf.if %2 {
      %cst_10 = arith.constant 0.000000e+00 : f32
      %12 = vector.broadcast %cst_10 : f32 to vector<16x96xf32>
      %c0_11 = arith.constant 0 : index
      %c0_12 = arith.constant 0 : index
      %13 = vector.load %arg7[%c0_11, %c0_12] : memref<16x96xf32, #tpu.memory_space<vmem>>, vector<16x96xf32>
      tpu.vector_store %arg7[%c0_11, %c0_12], %12 {strides = array<i32>} : memref<16x96xf32, #tpu.memory_space<vmem>>, vector<16x96xf32>,
    } else {
    }
    %c0 = arith.constant 0 : index
    %c0_1 = arith.constant 0 : index
    %3 = vector.load %arg7[%c0, %c0_1] : memref<16x96xf32, #tpu.memory_space<vmem>>, vector<16x96xf32>
    %c0_2 = arith.constant 0 : index
    %c0_3 = arith.constant 0 : index
    %4 = vector.load %arg3[%c0_2, %c0_3] : memref<16x32xbf16, #tpu.memory_space<vmem>>, vector<16x32xbf16>
    %c0_4 = arith.constant 0 : index
    %c0_5 = arith.constant 0 : index
    %5 = vector.load %arg4[%c0_4, %c0_5] : memref<32x96xbf16, #tpu.memory_space<vmem>>, vector<32x96xbf16>
    %cst = arith.constant dense<0.000000e+00> : vector<16x96xf32>
    %6 = tpu.matmul %4, %5, %cst {dimension_numbers = #tpu.dot_dimension_numbers<[1], [0], [0], [1], [0, 0, 1, 1], [], []>} : vector<16x32xbf16>, vector<32x96xbf16>, vector<16x96xf32> -> vector<16x96xf32>
    %7 = arith.addf %3, %6 : vector<16x96xf32>
    %c0_6 = arith.constant 0 : index
    %c0_7 = arith.constant 0 : index
    %8 = vector.load %arg7[%c0_6, %c0_7] : memref<16x96xf32, #tpu.memory_space<vmem>>, vector<16x96xf32>
    tpu.vector_store %arg7[%c0_6, %c0_7], %7 {strides = array<i32>} : memref<16x96xf32, #tpu.memory_space<vmem>>, vector<16x96xf32>,
    %c0_i32_8 = arith.constant 0 : i32
    %9 = arith.cmpi eq, %arg2, %c0_i32_8 : i32
    %10 = arith.extui %9 : i1 to i32
    %c0_i32_9 = arith.constant 0 : i32
    %11 = arith.cmpi ne, %10, %c0_i32_9 : i32
    scf.if %11 {
      %c0_10 = arith.constant 0 : index
      %c0_11 = arith.constant 0 : index
      %12 = vector.load %arg7[%c0_10, %c0_11] : memref<16x96xf32, #tpu.memory_space<vmem>>, vector<16x96xf32>
      %c0_12 = arith.constant 0 : index
      %c0_13 = arith.constant 0 : index
      %13 = vector.load %arg5[%c0_12, %c0_13] : memref<1x96xf32, #tpu.memory_space<vmem>>, vector<1x96xf32>
      %14 = vector.broadcast %13 : vector<1x96xf32> to vector<16x96xf32>
      %15 = arith.addf %12, %14 : vector<16x96xf32>
      %16 = arith.truncf %15 : vector<16x96xf32> to vector<16x96xbf16>
      %c0_14 = arith.constant 0 : index
      %c0_15 = arith.constant 0 : index
      %17 = vector.load %arg6[%c0_14, %c0_15] : memref<16x96xbf16, #tpu.memory_space<vmem>>, vector<16x96xbf16>
      tpu.vector_store %arg6[%c0_14, %c0_15], %16 {strides = array<i32>} : memref<16x96xbf16, #tpu.memory_space<vmem>>, vector<16x96xbf16>,
    } else {
    }
    return
  }
  func.func @transform_0(%arg0: i32, %arg1: i32, %arg2: i32) -> (i32, i32) {
    %c0_i32 = arith.constant 0 : i32
    return %arg0, %arg2 : i32, i32
  }
  func.func @transform_1(%arg0: i32, %arg1: i32, %arg2: i32) -> (i32, i32) {
    %c0_i32 = arith.constant 0 : i32
    return %arg2, %arg1 : i32, i32
  }
  func.func @transform_2(%arg0: i32, %arg1: i32, %arg2: i32) -> (i32, i32) {
    %c0_i32 = arith.constant 0 : i32
    %c0_i32_0 = arith.constant 0 : i32
    return %c0_i32, %arg1 : i32, i32
  }
  func.func @transform_3(%arg0: i32, %arg1: i32, %arg2: i32) -> (i32, i32) {
    %c0_i32 = arith.constant 0 : i32
    return %arg0, %arg1 : i32, i32
  }
}

</mosaic_0001>

<llo_original>
// kernel: tpu_custom_call.1
$region0: #{tpu_custom_call.1}
  #allocation0 [shape = 'u32[]', space=smem, size = 0x4, offset = 0x4, fixed_abs, tag = 'smem constant byte address 0x4 - core index']
  #allocation1 [shape = 'u32[144,128]{1,0:T(1,128)}', space=vmem, size = 0x12000, scoped, tag = 'internal scratch']
  %s0 = inlined_call_operand.hbm [shape: f32[8,128], index: 0, kind: input, shape index: {}]
  %s1 = inlined_call_operand.hbm [shape: f32[8,128], index: 1, kind: output, shape index: {}]
  %s2 = sld [smem:[#allocation0]]
  $region18: #{tpu_custom_call.1} parent=0
    _
  %s4 = ssub.s32 1, %s2
  %s5 = scalar_select 0, %s4, %s2
  $region1: #{tpu_custom_call.1} parent=0
    #allocation2 [shape = 'u8[4096]{0}', space=vmem, size = 0x1000, scoped, tag = 'input window, operand 0, single buffered']
    #allocation3 [shape = 's32[1]{0}', space=sflag, size = 0x4, scoped, tag = 'scoped memory for tpu_custom_call.1']
    #allocation4 [shape = 's32[1]{0}', space=sflag, size = 0x4, scoped, tag = 'scoped memory for tpu_custom_call.1']
    #allocation5 [shape = 'u8[4096]{0}', space=vmem, size = 0x1000, scoped, tag = 'output window, operand 0, single buffered']
    %6 = vsyncpa [#allocation3], 0
    %7 = vsyncpa [#allocation4], 0
    // Predicated region
    $region2: #{tpu_custom_call.1} parent=1 // pred_check
      _
    $region3: #{tpu_custom_call.1} parent=1 // pred_check_branch
      %9 = sbr.rel (0) target = $region5
    $region4: #{tpu_custom_call.1} parent=1 // pred_region
      %s11 = ssub.s32 128, 128
      %12 = vsyncadd [#allocation3], %s11
      %s14 = sshll.u32 [#allocation2], 4
      %s15 = int_to_ptr.vmem [resolvable:$true] %s14
      %17 = dma.hbm_to_vmem [thread:$0]  %s0, 128, %s15, [#allocation3]
    $region5: #{tpu_custom_call.1} parent=1 // pred_fallthru
      _
    // Predicated region
    $region6: #{tpu_custom_call.1} parent=1 // pred_check
      _
    $region7: #{tpu_custom_call.1} parent=1 // pred_check_branch
      %19 = sbr.rel (0) target = $region9
    $region8: #{tpu_custom_call.1} parent=1 // pred_region
      %20 = dma.done [#allocation3], 128
    $region9: #{tpu_custom_call.1} parent=1 // pred_fallthru
      _
    %v21 = vld [vmem:[#allocation2] sm:$0xff]
    %22 = vst [vmem:[#allocation5] sm:$0xff] %v21
    // Predicated region
    $region10: #{tpu_custom_call.1} parent=1 // pred_check
      _
    $region11: #{tpu_custom_call.1} parent=1 // pred_check_branch
      %24 = sbr.rel (0) target = $region13
    $region12: #{tpu_custom_call.1} parent=1 // pred_region
      %s26 = ssub.s32 128, 128
      %27 = vsyncadd [#allocation4], %s26
      %s29 = sshll.u32 [#allocation5], 4
      %s30 = int_to_ptr.vmem [resolvable:$true] %s29
      %32 = dma.vmem_to_hbm [thread:$0]  %s30, 128, %s1, [#allocation4]
    $region13: #{tpu_custom_call.1} parent=1 // pred_fallthru
      _
    // Predicated region
    $region14: #{tpu_custom_call.1} parent=1 // pred_check
      _
    $region15: #{tpu_custom_call.1} parent=1 // pred_check_branch
      %34 = sbr.rel (0) target = $region17
    $region16: #{tpu_custom_call.1} parent=1 // pred_region
      %35 = dma.done [#allocation4], 128
    $region17: #{tpu_custom_call.1} parent=1 // pred_fallthru
      _
    %36 = vsyncpa [#allocation3], 1
    %37 = vsyncpa [#allocation4], 1

// kernel: tpu_custom_call.1
$region0: #{tpu_custom_call.1}
  #allocation0 [shape = 'u32[]', space=smem, size = 0x4, offset = 0x4, fixed_abs, tag = 'smem constant byte address 0x4 - core index']
  #allocation1 [shape = 'u32[144,128]{1,0:T(1,128)}', space=vmem, size = 0x12000, scoped, tag = 'internal scratch']
  #allocation2 [shape = 'f32[16,96]{1,0:T(8,128)}', space=vmem, size = 0x2000, scoped, tag = 'scratch operand']
  %s0 = inlined_call_operand.hbm [shape: bf16[16,32], index: 0, kind: input, shape index: {}]
  %s1 = inlined_call_operand.hbm [shape: bf16[32,96], index: 1, kind: input, shape index: {}]
  %s2 = inlined_call_operand.vmem [shape: f32[1,96], index: 2, kind: input, shape index: {}]
  %s3 = inlined_call_operand.hbm [shape: bf16[16,96], index: 3, kind: output, shape index: {}]
  %s4 = sld [smem:[#allocation0]]
  $region38: #{tpu_custom_call.1} parent=0
    _
  %s6 = ssub.s32 1, %s4
  %s7 = scalar_select 0, %s6, %s4
  $region1: #{tpu_custom_call.1} parent=0
    #allocation3 [shape = 'u8[4096]{0}', space=vmem, size = 0x1000, scoped, tag = 'input window, operand 0, single buffered']
    #allocation4 [shape = 's32[1]{0}', space=sflag, size = 0x4, scoped, tag = 'scoped memory for tpu_custom_call.1']
    #allocation5 [shape = 's32[1]{0}', space=sflag, size = 0x4, scoped, tag = 'scoped memory for tpu_custom_call.1']
    #allocation6 [shape = 'u8[8192]{0}', space=vmem, size = 0x2000, scoped, tag = 'input window, operand 1, single buffered']
    #allocation7 [shape = 's32[1]{0}', space=sflag, size = 0x4, scoped, tag = 'scoped memory for tpu_custom_call.1']
    #allocation8 [shape = 'u8[4096]{0}', space=vmem, size = 0x1000, scoped, tag = 'output window, operand 0, single buffered']
    %8 = vsyncpa [#allocation4], 0
    %9 = vsyncpa [#allocation7], 0
    %10 = vsyncpa [#allocation5], 0
    // Predicated region
    $region2: #{tpu_custom_call.1} parent=1 // pred_check
      _
    $region3: #{tpu_custom_call.1} parent=1 // pred_check_branch
      %12 = sbr.rel (0) target = $region5
    $region4: #{tpu_custom_call.1} parent=1 // pred_region
      %s14 = ssub.s32 128, 128
      %15 = vsyncadd [#allocation4], %s14
      %s16 = sshll.u32 [#allocation3], 4
      %s17 = int_to_ptr.vmem [resolvable:$true] %s16
      %22 = dma.hbm_to_vmem [thread:$0]  %s0, 128, %s17, [#allocation4], 64, 64, 4
    $region5: #{tpu_custom_call.1} parent=1 // pred_fallthru
      _
    // Predicated region
    $region6: #{tpu_custom_call.1} parent=1 // pred_check
      _
    $region7: #{tpu_custom_call.1} parent=1 // pred_check_branch
      %24 = sbr.rel (0) target = $region9
    $region8: #{tpu_custom_call.1} parent=1 // pred_region
      %s26 = ssub.s32 256, 256
      %27 = vsyncadd [#allocation7], %s26
      %s28 = sshll.u32 [#allocation6], 4
      %s29 = int_to_ptr.vmem [resolvable:$true] %s28
      %34 = dma.hbm_to_vmem [thread:$0]  %s1, 256, %s29, [#allocation7], 64, 64, 4
    $region9: #{tpu_custom_call.1} parent=1 // pred_fallthru
      _
    // Predicated region
    $region10: #{tpu_custom_call.1} parent=1 // pred_check
      _
    $region11: #{tpu_custom_call.1} parent=1 // pred_check_branch
      %36 = sbr.rel (0) target = $region13
    $region12: #{tpu_custom_call.1} parent=1 // pred_region
      _
    $region13: #{tpu_custom_call.1} parent=1 // pred_fallthru
      _
    // Predicated region
    $region14: #{tpu_custom_call.1} parent=1 // pred_check
      _
    $region15: #{tpu_custom_call.1} parent=1 // pred_check_branch
      %38 = sbr.rel (0) target = $region17
    $region16: #{tpu_custom_call.1} parent=1 // pred_region
      %39 = dma.done [#allocation4], 128
    $region17: #{tpu_custom_call.1} parent=1 // pred_fallthru
      _
    // Predicated region
    $region18: #{tpu_custom_call.1} parent=1 // pred_check
      _
    $region19: #{tpu_custom_call.1} parent=1 // pred_check_branch
      %41 = sbr.rel (0) target = $region21
    $region20: #{tpu_custom_call.1} parent=1 // pred_region
      %42 = dma.done [#allocation7], 256
    $region21: #{tpu_custom_call.1} parent=1 // pred_fallthru
      _
    %p44 = scmp.eq.s32.totalorder 0, 0
    // Predicated region
    $region22: #{tpu_custom_call.1} parent=1 // pred_check
      %p45 = pneg %p44
    $region23: #{tpu_custom_call.1} parent=1 // pred_check_branch
      %47 = sbr.rel (%p45) target = $region25
    $region24: #{tpu_custom_call.1} parent=1 // pred_region
      %vm48 = vcmask 785408
      %49 = vst.msk [vmem:[#allocation2] sm:$0xff] %vm48, 0.0
      %50 = vst.msk [vmem:[#allocation2 + $0x8] sm:$0xff] %vm48, 0.0
    $region25: #{tpu_custom_call.1} parent=1 // pred_fallthru
      _
    %v51 = vld [vmem:[#allocation2] sm:$0xff]
    %v52 = vld [vmem:[#allocation2 + $0x8] sm:$0xff]
    %v53 = vld [vmem:[#allocation3] sm:$0xf]
    %v54 = vld [vmem:[#allocation3 + $0x4] sm:$0xf]
    %v55 = vld [vmem:[#allocation6] sm:$0xf]
    %v56 = vld [vmem:[#allocation6 + $0x4] sm:$0xf]
    %v57 = vld [vmem:[#allocation6 + $0x8] sm:$0xf]
    %v58 = vld [vmem:[#allocation6 + $0xc] sm:$0xf]
    %v61 = vunpack.c.l.b16 %v53
    %v62 = vunpack.c.l.b16 %v54
    %v63 = vpack.c.b16 %v62, %v61
    %v68 = vunpack.c.l.b16 %v55
    %v69 = vunpack.c.l.b16 %v56
    %v70 = vunpack.c.l.b16 %v57
    %v71 = vunpack.c.l.b16 %v58
    %v72 = vpack.c.b16 %v69, %v68
    %v73 = vpack.c.b16 %v71, %v70
    %vm76 = vcmask 261120
    %v78 = vsel %vm76, %v63, 0
    %80 = vmatprep.subr.bf16.mxu0 0
    %81 = vmatpush1.bf16.msra.mxu0 %v72
    %82 = vmatprep.subr.bf16.mxu0 0
    %83 = vmatpush1.bf16.msra.mxu0 %v73
    %84 = vmatprep.subr.bf16.mxu0 0
    %85 = vmatpush1.bf16.msra.mxu0 0
    %86 = vmatprep.subr.bf16.mxu0 0
    %87 = vmatpush1.bf16.msra.mxu0 0
    %88 = vmatprep.subr.bf16.mxu0 0
    %89 = vmatpush1.bf16.msra.mxu0 0
    %90 = vmatprep.subr.bf16.mxu0 0
    %91 = vmatpush1.bf16.msra.mxu0 0
    %92 = vmatprep.subr.bf16.mxu0 0
    %93 = vmatpush1.bf16.msra.mxu0 0
    %94 = vmatprep.subr.bf16.mxu0 0
    %95 = vmatpush1.bf16.msra.mxu0 0
    %96 = vmatprep.subr.bf16.mxu0 0
    %97 = vmatpush1.bf16.msra.mxu0 0
    %98 = vmatprep.subr.bf16.mxu0 0
    %99 = vmatpush1.bf16.msra.mxu0 0
    %100 = vmatprep.subr.bf16.mxu0 0
    %101 = vmatpush1.bf16.msra.mxu0 0
    %102 = vmatprep.subr.bf16.mxu0 0
    %103 = vmatpush1.bf16.msra.mxu0 0
    %104 = vmatprep.subr.bf16.mxu0 0
    %105 = vmatpush1.bf16.msra.mxu0 0
    %106 = vmatprep.subr.bf16.mxu0 0
    %107 = vmatpush1.bf16.msra.mxu0 0
    %108 = vmatprep.subr.bf16.mxu0 0
    %109 = vmatpush1.bf16.msra.mxu0 0
    %110 = vmatprep.subr.bf16.mxu0 0
    %111 = vmatpush1.bf16.msra.mxu0 0
    %112 = vmatprep.mubr.bf16.mxu0 0
    %113 = vmatmul.mubr.bf16.gmra.mrb[0].mxu0 %v78
    %v114 = vpop.f32.mrb[0].mxu0
    %v115 = vadd.f32 0.0, %v114
    %v116 = vpop.f32.mrb[0].mxu0
    %v117 = vpop.f32.mrb[0].mxu0
    %v118 = vadd.f32 0.0, %v117
    %v119 = vpop.f32.mrb[0].mxu0
    %120 = vdwg.mxu0
    %v121 = vadd.f32 %v51, %v115
    %v122 = vadd.f32 %v52, %v118
    %vm123 = vcmask 785408
    %124 = vst.msk [vmem:[#allocation2] sm:$0xff] %vm123, %v121
    %125 = vst.msk [vmem:[#allocation2 + $0x8] sm:$0xff] %vm123, %v122
    // Predicated region
    $region26: #{tpu_custom_call.1} parent=1 // pred_check
      %p126 = pneg %p44
    $region27: #{tpu_custom_call.1} parent=1 // pred_check_branch
      %128 = sbr.rel (%p126) target = $region29
    $region28: #{tpu_custom_call.1} parent=1 // pred_region
      %v129 = vld [vmem:[#allocation2] sm:$0xff]
      %v130 = vld [vmem:[#allocation2 + $0x8] sm:$0xff]
      %v131 = vld [vmem:[%s2] sm:$0x1]
      %v133 = vlaneseq
      %v134 = vshrl.u32 %v133, 7
      %v135 = vsub.s32 0, %v134
      %v136 = vrot.slane %v131, %v135
      %v138 = vadd.f32 %v129, %v136
      %v139 = vadd.f32 %v130, %v136
      %v140 = vpack.c.bf16 %v139, %v138
      %v142 = vunpack.c.l.b16 %v140
      %v143 = vunpack.c.h.b16 %v140
      %v144 = vpack.c.b16 %v142, %v142
      %v145 = vpack.c.b16 %v143, %v143
      %vm148 = vcmask 781312
      %149 = vst.msk [vmem:[#allocation8] sm:$0xf] %vm148, %v144
      %150 = vst.msk [vmem:[#allocation8 + $0x4] sm:$0xf] %vm148, %v145
    $region29: #{tpu_custom_call.1} parent=1 // pred_fallthru
      _
    // Predicated region
    $region30: #{tpu_custom_call.1} parent=1 // pred_check
      _
    $region31: #{tpu_custom_call.1} parent=1 // pred_check_branch
      %152 = sbr.rel (0) target = $region33
    $region32: #{tpu_custom_call.1} parent=1 // pred_region
      %s154 = ssub.s32 128, 128
      %155 = vsyncadd [#allocation5], %s154
      %s156 = sshll.u32 [#allocation8], 4
      %s157 = int_to_ptr.vmem [resolvable:$true] %s156
      %162 = dma.vmem_to_hbm [thread:$0]  %s157, 128, %s3, [#allocation5], 64, 64, 4
    $region33: #{tpu_custom_call.1} parent=1 // pred_fallthru
      _
    // Predicated region
    $region34: #{tpu_custom_call.1} parent=1 // pred_check
      _
    $region35: #{tpu_custom_call.1} parent=1 // pred_check_branch
      %164 = sbr.rel (0) target = $region37
    $region36: #{tpu_custom_call.1} parent=1 // pred_region
      %165 = dma.done [#allocation5], 128
    $region37: #{tpu_custom_call.1} parent=1 // pred_fallthru
      _
    %166 = vsyncpa [#allocation4], 1
    %167 = vsyncpa [#allocation7], 1
    %168 = vsyncpa [#allocation5], 1

</llo_original>
